<compile_context>
chip_gen: v7x
topology: tpu7x:2x2x1
jax: 0.10.0
libtpu: 0.0.40
codegen_flags: <defaults>
</compile_context>

<pallas_src>
import jax
import jax.numpy as jnp
from jax.experimental import pallas as pl
from jax.experimental.pallas import tpu as pltpu

LANES = 128
DEFAULT_TILE_ROWS = 2048      # 2048 x 128 x 4B = 1 MiB per f32 buffer


def _round_up(x, m):
    return ((x + m - 1) // m) * m


def _contrast_relu_kernel(wbc_ref, dom_ref, out_ref):
    # wbc_ref: SMEM f32[3] = [w/16, b, 0.8 + b]   (folded in the wrapper)
    w16 = wbc_ref[0]
    b = wbc_ref[1]
    c = wbc_ref[2]
    # Cast in-kernel so narrow (e.g. bf16) inputs are DMA'd at half the bytes.
    x = dom_ref[...].astype(jnp.float32)                  # (tile_rows, 128)
    # |sigmoid(x) - 0.5|**4 == tanh(x/2)**4 / 16  (exact; one EUP op per element)
    t = jnp.tanh(0.5 * x)
    t2 = t * t
    t4 = t2 * t2
    out_ref[...] = jnp.maximum(c - w16 * t4, b)           # max(0.8 - w*var^4 + b, b)


def contrast_relu_activate(dom_res, dom_label, init_weight,
                           dom_func_weight, dom_func_bias,
                           weight_scale, add_bias,
                           tile_rows=DEFAULT_TILE_ROWS,
                           alias_input=False):
    """JAX/Pallas forward of Contrast_ReLU_activate.

    Returns (final_weight, w_scalar, b_scalar), mirroring the torch module's
    (final_weight, w.squeeze().data[0], b.squeeze().data[0]).
    dom_label / init_weight are unused by the forward math (as in PyTorch, where
    init_weight only fixes the broadcast shape).
    """
    del dom_label, init_weight

    w_scalar = (jnp.asarray(dom_func_weight, jnp.float32).reshape(-1)[0]
                * jnp.float32(weight_scale))
    b_scalar = (jnp.asarray(dom_func_bias, jnp.float32).reshape(-1)[0]
                + jnp.float32(add_bias))
    w16 = w_scalar * jnp.float32(1.0 / 16.0)          # folds the tanh identity's 1/16
    c_scalar = jnp.float32(0.8) + b_scalar            # hoisted scalar epilogue

    if not jnp.issubdtype(dom_res.dtype, jnp.floating):
        dom_res = dom_res.astype(jnp.float32)
    in_dtype = dom_res.dtype
    itemsize = jnp.dtype(in_dtype).itemsize
    # Sublane packing: f32 -> (8,128) tiles, bf16 -> (16,128), fp8/int8 -> (32,128).
    row_align = max(8, 32 // max(itemsize, 1))

    dom_flat = dom_res.reshape(-1)                    # safe for (N,1) and (1,1)
    n = dom_flat.shape[0]

    tile_rows = max(_round_up(tile_rows, row_align), row_align)
    rows_needed = -(-n // LANES) if n else 1
    rows_min = _round_up(max(rows_needed, 1), row_align)
    if rows_min > tile_rows:
        tr = tile_rows
    elif rows_min >= 2 * row_align:
        # >=2 grid steps so v7x megacore can shard the parallel axis over 2 TCs.
        tr = _round_up(-(-rows_min // 2), row_align)
    else:
        tr = rows_min
    rows = _round_up(rows_min, tr)
    n_pad = rows * LANES
    num_tiles = rows // tr

    # Pad only when the tail is ragged; aligned inputs take the copy-free path.
    x_flat = dom_flat if n_pad == n else jnp.pad(dom_flat, (0, n_pad - n))
    x = x_flat.reshape(rows, LANES)

    wbc = jnp.stack([w16, b_scalar, c_scalar])        # f32[3] -> SMEM

    # Aliasing the (temporary, padded) input buffer onto the output saves an HBM
    # allocation when this wrapper runs inside a larger jit; under eager execution
    # XLA inserts a defensive copy instead, so it stays off by default.
    aliases = {1: 0} if (alias_input and in_dtype == jnp.float32) else {}

    cost = pl.CostEstimate(flops=6 * n_pad, transcendentals=n_pad,
                           bytes_accessed=n_pad * (itemsize + 4))

    out2d = pl.pallas_call(
        _contrast_relu_kernel,
        out_shape=jax.ShapeDtypeStruct((rows, LANES), jnp.float32),
        grid=(num_tiles,),
        in_specs=[
            pl.BlockSpec(memory_space=pltpu.MemorySpace.SMEM),   # scalars, untiled
            pl.BlockSpec((tr, LANES), lambda i: (i, 0)),         # dom_res tiles
        ],
        out_specs=pl.BlockSpec((tr, LANES), lambda i: (i, 0)),
        input_output_aliases=aliases,
        cost_estimate=cost,
        compiler_params=pltpu.CompilerParams(
            dimension_semantics=("parallel",)),                  # megacore sharding
    )(wbc, x)

    out_flat = out2d.reshape(n_pad)
    final_weight = out_flat if n_pad == n else out_flat[:n]
    return final_weight, w_scalar, b_scalar


def _reference(dom_res_f32, w_ref, b_ref):
    prob = jax.nn.sigmoid(dom_res_f32.reshape(-1))
    var = jnp.abs(prob - 0.5)
    return jnp.maximum(0.8 - w_ref * var ** 4 + b_ref, jnp.full_like(var, b_ref))


if __name__ == "__main__":
    key = jax.random.PRNGKey(0)

    # Deterministic parameter init (matches the module's __init__):
    dom_func_weight = jnp.ones((1,), jnp.float32)     # nn.Parameter(torch.ones(1))
    dom_func_bias = jnp.zeros((1,), jnp.float32)      # Variable(FloatTensor([0]))
    init_weight_scale = 2.0                           # initWeightScale
    init_bias = 0.1                                   # initBias
    w_ref = 1.0 * init_weight_scale
    b_ref = 0.0 + init_bias

    # (N, dtype): aligned copy-free path, ragged f32 path, ragged multi-tile bf16.
    cases = [(2048, jnp.float32), (300, jnp.float32), (4100, jnp.bfloat16)]
    for N, dt in cases:
        k1, key = jax.random.split(key)
        dom_res = jax.random.normal(k1, (N, 1), dtype=jnp.float32).astype(dt)
        dom_label = jnp.concatenate([jnp.zeros((N // 2,), jnp.int32),
                                     jnp.ones((N - N // 2,), jnp.int32)])
        init_weight = jnp.ones((N,), jnp.float32)

        final_weight, w_s, b_s = contrast_relu_activate(
            dom_res, dom_label, init_weight,
            dom_func_weight, dom_func_bias, init_weight_scale, init_bias)
        jax.block_until_ready((final_weight, w_s, b_s))

        ref = _reference(dom_res.astype(jnp.float32), w_ref, b_ref)
        assert final_weight.shape == (N,)
        # Exact tanh-based formulation: only f32 rounding / HW tanh precision left.
        assert jnp.allclose(final_weight, ref, atol=1e-4), "kernel/reference mismatch"
        assert jnp.allclose(w_s, w_ref) and jnp.allclose(b_s, b_ref)

    print("KERNEL_OK")
</pallas_src>

<mosaic_0001>
module attributes {stable_mosaic.version = 11 : i64} {
  func.func @_contrast_relu_kernel(%arg0: i32, %arg1: memref<3xf32, #tpu.memory_space<smem>>, %arg2: memref<8x128xf32, #tpu.memory_space<vmem>>, %arg3: memref<8x128xf32, #tpu.memory_space<vmem>>) attributes {dimension_semantics = [#tpu.dimension_semantics<parallel>], iteration_bounds = array<i64: 2>, scalar_prefetch = 0 : i64, scratch_operands = 0 : i64, tpu.core_type = #tpu.core_type<tc>, window_params = [{transform_indices = @transform_0, window_bounds = array<i64: 3>}, {transform_indices = @transform_1, window_bounds = array<i64: 8, 128>}, {transform_indices = @transform_2, window_bounds = array<i64: 8, 128>}]} {
    %c0 = arith.constant 0 : index
    %0 = memref.load %arg1[%c0] : memref<3xf32, #tpu.memory_space<smem>>
    %c1 = arith.constant 1 : index
    %1 = memref.load %arg1[%c1] : memref<3xf32, #tpu.memory_space<smem>>
    %c2 = arith.constant 2 : index
    %2 = memref.load %arg1[%c2] : memref<3xf32, #tpu.memory_space<smem>>
    %c0_0 = arith.constant 0 : index
    %c0_1 = arith.constant 0 : index
    %3 = vector.load %arg2[%c0_0, %c0_1] : memref<8x128xf32, #tpu.memory_space<vmem>>, vector<8x128xf32>
    %cst = arith.constant 5.000000e-01 : f32
    %4 = vector.broadcast %cst : f32 to vector<8x128xf32>
    %5 = arith.mulf %4, %3 : vector<8x128xf32>
    %6 = math.tanh %5 : vector<8x128xf32>
    %7 = arith.mulf %6, %6 : vector<8x128xf32>
    %8 = arith.mulf %7, %7 : vector<8x128xf32>
    %9 = vector.broadcast %0 : f32 to vector<8x128xf32>
    %10 = arith.mulf %9, %8 : vector<8x128xf32>
    %11 = vector.broadcast %2 : f32 to vector<8x128xf32>
    %12 = arith.subf %11, %10 : vector<8x128xf32>
    %13 = vector.broadcast %1 : f32 to vector<8x128xf32>
    %14 = arith.maximumf %12, %13 : vector<8x128xf32>
    %c0_2 = arith.constant 0 : index
    %c0_3 = arith.constant 0 : index
    %15 = vector.load %arg3[%c0_2, %c0_3] : memref<8x128xf32, #tpu.memory_space<vmem>>, vector<8x128xf32>
    tpu.vector_store %arg3[%c0_2, %c0_3], %14 {strides = array<i32>} : memref<8x128xf32, #tpu.memory_space<vmem>>, vector<8x128xf32>,
    return
  }
  func.func @transform_0(%arg0: i32) -> i32 {
    %c0_i32 = arith.constant 0 : i32
    %c0_i32_0 = arith.constant 0 : i32
    return %c0_i32 : i32
  }
  func.func @transform_1(%arg0: i32) -> (i32, i32) {
    %c0_i32 = arith.constant 0 : i32
    %c0_i32_0 = arith.constant 0 : i32
    return %arg0, %c0_i32 : i32, i32
  }
  func.func @transform_2(%arg0: i32) -> (i32, i32) {
    %c0_i32 = arith.constant 0 : i32
    %c0_i32_0 = arith.constant 0 : i32
    return %arg0, %c0_i32 : i32, i32
  }
}

</mosaic_0001>

<llo_original>
// kernel: tpu_custom_call.1
$region0: #{tpu_custom_call.1}
  #allocation0 [shape = 'u32[]', space=smem, size = 0x4, offset = 0x4, fixed_abs, tag = 'smem constant byte address 0x4 - core index']
  #allocation1 [shape = 'u32[144,128]{1,0:T(1,128)}', space=vmem, size = 0x12000, scoped, tag = 'internal scratch']
  %s0 = inlined_call_operand.hbm [shape: f32[3], index: 0, kind: input, shape index: {}]
  %s1 = inlined_call_operand.hbm [shape: f32[16,128], index: 1, kind: input, shape index: {}]
  %s2 = inlined_call_operand.hbm [shape: f32[16,128], index: 2, kind: output, shape index: {}]
  %s3 = sld [smem:[#allocation0]]
  $region49: #{tpu_custom_call.1} parent=0
    _
  %s5 = ssub.s32 1, %s3
  %s6 = scalar_select 0, %s5, %s3
  $region1: #{tpu_custom_call.1} parent=0
    #allocation2 [shape = 'u8[512]{0}', space=smem, size = 0x200, scoped, tag = 'input window, operand 0, single buffered']
    #allocation3 [shape = 's32[2]{0}', space=sflag, size = 0x8, scoped, tag = 'scoped memory for tpu_custom_call.1']
    #allocation4 [shape = 's32[2]{0}', space=sflag, size = 0x8, scoped, tag = 'scoped memory for tpu_custom_call.1']
    #allocation5 [shape = 's32[2]{0}', space=sflag, size = 0x8, scoped, tag = 'scoped memory for tpu_custom_call.1']
    #allocation6 [shape = 'u8[8192]{0}', space=vmem, size = 0x2000, scoped, tag = 'input window, operand 1']
    #allocation7 [shape = 'u8[8192]{0}', space=vmem, size = 0x2000, scoped, tag = 'output window, operand 0']
    %7 = vsyncpa [#allocation5], 0
    %8 = vsyncpa [#allocation3], 0
    %s9 = scalar_lea.sflag [#allocation3], 1
    %10 = vsyncpa %s9, 0
    %11 = vsyncpa [#allocation4], 0
    %s12 = scalar_lea.sflag [#allocation4], 1
    %13 = vsyncpa %s12, 0
    loop: start=0, step=1, limit=4
    $region2: #{tpu_custom_call.1} parent=1 // loop_pre_header
      _
    $region3: #{tpu_custom_call.1} parent=1 // loop_header
      %s15 = sphi 0, %s19
      %p16 = scmp.ge.s32.totalorder %s15, 4
      %s23 = sphi 0, %s23
      %s25 = sphi 0, %s23
      %s26 = sphi 0, %s25
      %s40 = sphi 0, %s26
      %s46 = sphi 0, %s48
      %s49 = sphi 0, %s46
      %s50 = sphi 0, %s49
      %s66 = sphi 0, %s50
      %s72 = sphi 0, %s74
      %s75 = sphi 0, %s72
      %s76 = sphi 0, %s75
      %s92 = sphi 0, %s76
    $region4: #{tpu_custom_call.1} parent=1 // loop_header_branch
      %18 = sbr.rel (%p16) target = $region8
    $region5: #{tpu_custom_call.1} parent=1 // loop_body
      %s20 = ssub.s32 %s15, 1
      %s21 = ssub.s32 %s15, 2
      %s22 = sadd.s32 %s15, 1
      %s24 = sadd.s32 %s23, 1
      %p27 = scmp.eq.s32.totalorder %s15, 1
      %p28 = scmp.ne.s32.totalorder %s23, %s25
      %p29 = scmp.eq.s32.totalorder %s15, 0
      %p30 = por %p28, %p29
      %p31 = scmp.ne.s32.totalorder %s23, %s25
      %p32 = scmp.eq.s32.totalorder %s20, 1
      %p33 = por %p31, %p32
      %p34 = scmp.ne.s32.totalorder %s25, %s26
      %p35 = scmp.eq.s32.totalorder %s20, 0
      %p36 = por %p34, %p35
      %p37 = scmp.ne.s32.totalorder %s25, %s26
      %p38 = scmp.eq.s32.totalorder %s21, 1
      %p39 = por %p37, %p38
      %p41 = scmp.ne.s32.totalorder %s26, %s40
      %p42 = scmp.eq.s32.totalorder %s21, 0
      %p43 = por %p41, %p42
      %s44 = ssub.s32 %s15, %s22
      %p45 = scmp.eq.s32.totalorder %s44, 0
      %s47 = sadd.s32 %s46, 1
      %s48 = scalar_select %p45, %s46, %s47
      %p51 = pneg %p45
      %p52 = scmp.eq.s32.totalorder %s15, 1
      %p53 = por %p51, %p52
      %p54 = scmp.ne.s32.totalorder %s46, %s49
      %p55 = scmp.eq.s32.totalorder %s15, 0
      %p56 = por %p54, %p55
      %p57 = scmp.ne.s32.totalorder %s46, %s49
      %p58 = scmp.eq.s32.totalorder %s20, 1
      %p59 = por %p57, %p58
      %p60 = scmp.ne.s32.totalorder %s49, %s50
      %p61 = scmp.eq.s32.totalorder %s20, 0
      %p62 = por %p60, %p61
      %p63 = scmp.ne.s32.totalorder %s49, %s50
      %p64 = scmp.eq.s32.totalorder %s21, 1
      %p65 = por %p63, %p64
      %p67 = scmp.ne.s32.totalorder %s50, %s66
      %p68 = scmp.eq.s32.totalorder %s21, 0
      %p69 = por %p67, %p68
      %s70 = ssub.s32 %s15, %s22
      %p71 = scmp.eq.s32.totalorder %s70, 0
      %s73 = sadd.s32 %s72, 1
      %s74 = scalar_select %p71, %s72, %s73
      %p77 = pneg %p71
      %p78 = scmp.eq.s32.totalorder %s15, 1
      %p79 = por %p77, %p78
      %p80 = scmp.ne.s32.totalorder %s72, %s75
      %p81 = scmp.eq.s32.totalorder %s15, 0
      %p82 = por %p80, %p81
      %p83 = scmp.ne.s32.totalorder %s72, %s75
      %p84 = scmp.eq.s32.totalorder %s20, 1
      %p85 = por %p83, %p84
      %p86 = scmp.ne.s32.totalorder %s75, %s76
      %p87 = scmp.eq.s32.totalorder %s20, 0
      %p88 = por %p86, %p87
      %p89 = scmp.ne.s32.totalorder %s75, %s76
      %p90 = scmp.eq.s32.totalorder %s21, 1
      %p91 = por %p89, %p90
      %p93 = scmp.ne.s32.totalorder %s76, %s92
      %p94 = scmp.eq.s32.totalorder %s21, 0
      %p95 = por %p93, %p94
      %p96 = scmp.le.s32.totalorder 1, %s15
      %p97 = scmp.lt.s32.totalorder %s15, 3
      %p98 = pnand %p96, %p97
      %p99 = pneg %p98
      // Predicated region
      $region9: #{tpu_custom_call.1} parent=5 // pred_check
        _
      $region10: #{tpu_custom_call.1} parent=5 // pred_check_branch
        %101 = sbr.rel (%p98) target = $region12
      $region11: #{tpu_custom_call.1} parent=5 // pred_region
        %s102 = ssub.s32 %s15, 1
        // Predicated region
        $region13: #{tpu_custom_call.1} parent=11 // pred_check
          %p103 = pneg %p36
        $region14: #{tpu_custom_call.1} parent=11 // pred_check_branch
          %105 = sbr.rel (%p103) target = $region16
        $region15: #{tpu_custom_call.1} parent=11 // pred_region
          %s107 = ssub.s32 16, 16
          %108 = vsyncadd [#allocation5], %s107
          %111 = dma.hbm_to_smem %s0, 16, [#allocation2], [#allocation5]
        $region16: #{tpu_custom_call.1} parent=11 // pred_fallthru
          _
      $region12: #{tpu_custom_call.1} parent=5 // pred_fallthru
        _
      %p112 = scmp.lt.s32.totalorder %s15, 2
      // Predicated region
      $region17: #{tpu_custom_call.1} parent=5 // pred_check
        %p113 = pneg %p112
      $region18: #{tpu_custom_call.1} parent=5 // pred_check_branch
        %115 = sbr.rel (%p113) target = $region20
      $region19: #{tpu_custom_call.1} parent=5 // pred_region
        // Predicated region
        $region21: #{tpu_custom_call.1} parent=19 // pred_check
          %p116 = pneg %p56
        $region22: #{tpu_custom_call.1} parent=19 // pred_check_branch
          %118 = sbr.rel (%p116) target = $region24
        $region23: #{tpu_custom_call.1} parent=19 // pred_region
          %s119 = sand.u32 %s46, 1
          %s120 = scalar_lea.sflag [#allocation3], %s119
          %s121 = sand.u32 %s46, 1
          %s122 = smul.addr %s121, 8
          %s123 = scalar_lea.vmem [#allocation6], %s122
          %s125 = ssub.s32 128, 128
          %126 = vsyncadd %s120, %s125
          %s127 = smul.addr %s15, 128
          %s128 = scalar_lea.hbm %s1, %s127
          %s130 = sshll.u32 %s123, 4
          %s131 = int_to_ptr.vmem [resolvable:$true] %s130
          %133 = dma.hbm_to_vmem [thread:$0]  %s128, 128, %s131, %s120
        $region24: #{tpu_custom_call.1} parent=19 // pred_fallthru
          _
      $region20: #{tpu_custom_call.1} parent=5 // pred_fallthru
        _
      %p134 = scmp.le.s32.totalorder 1, %s15
      %p135 = scmp.lt.s32.totalorder %s15, 3
      %p136 = pnand %p134, %p135
      %p137 = pneg %p136
      // Predicated region
      $region25: #{tpu_custom_call.1} parent=5 // pred_check
        _
      $region26: #{tpu_custom_call.1} parent=5 // pred_check_branch
        %139 = sbr.rel (%p136) target = $region28
      $region27: #{tpu_custom_call.1} parent=5 // pred_region
        %s140 = ssub.s32 %s15, 1
        // Predicated region
        $region29: #{tpu_custom_call.1} parent=27 // pred_check
          %p141 = pneg %p36
        $region30: #{tpu_custom_call.1} parent=27 // pred_check_branch
          %143 = sbr.rel (%p141) target = $region32
        $region31: #{tpu_custom_call.1} parent=27 // pred_region
          %144 = dma.done [#allocation5], 16
        $region32: #{tpu_custom_call.1} parent=27 // pred_fallthru
          _
        %s145 = sand.u32 %s49, 1
        %s146 = scalar_lea.sflag [#allocation3], %s145
        %s147 = sand.u32 %s49, 1
        %s148 = smul.addr %s147, 8
        %s149 = scalar_lea.vmem [#allocation6], %s148
        // Predicated region
        $region33: #{tpu_custom_call.1} parent=27 // pred_check
          %p150 = pneg %p62
        $region34: #{tpu_custom_call.1} parent=27 // pred_check_branch
          %152 = sbr.rel (%p150) target = $region36
        $region35: #{tpu_custom_call.1} parent=27 // pred_region
          %153 = dma.done %s146, 128
        $region36: #{tpu_custom_call.1} parent=27 // pred_fallthru
          _
        %154 = sfence
        %p155 = pneg %p36
        %p156 = pneg %p33
        %s157 = sand.u32 %s49, 1
        %s158 = scalar_lea.sflag [#allocation3], %s157
        %s159 = sand.u32 %s49, 1
        %s160 = smul.addr %s159, 8
        %s161 = scalar_lea.vmem [#allocation6], %s160
        %p162 = pneg %p62
        %p163 = pneg %p59
        %p164 = pneg %p88
        %p165 = pneg %p85
        %s166 = sand.u32 %s75, 1
        %s167 = scalar_lea.sflag [#allocation4], %s166
        %s168 = sand.u32 %s75, 1
        %s169 = smul.addr %s168, 8
        %s170 = scalar_lea.vmem [#allocation7], %s169
        %s171 = sld [smem:[#allocation2]]
        %s172 = sld [smem:[#allocation2 + $0x1]]
        %s173 = sld [smem:[#allocation2 + $0x2]]
        %v174 = vld [vmem:[%s149] sm:$0xff]
        %v175 = vmul.f32 %v174, 0.5
        %v176 = vtanh.pop %v175
        %v177 = vmul.f32 %v176, %v176
        %v178 = vmul.f32 %v177, %v177
        %v179 = vstv %s171
        %v180 = vmul.f32 %v179, %v178
        %v181 = vstv %s173
        %v182 = vsub.f32 %v181, %v180
        %v183 = vstv %s172
        %v184 = vmax.f32 %v182, %v183
        %185 = vst [vmem:[%s170] sm:$0xff] %v184
        %s186 = sand.u32 %s75, 1
        %s187 = scalar_lea.sflag [#allocation4], %s186
        %s188 = sand.u32 %s75, 1
        %s189 = smul.addr %s188, 8
        %s190 = scalar_lea.vmem [#allocation7], %s189
        // Predicated region
        $region37: #{tpu_custom_call.1} parent=27 // pred_check
          %p191 = pneg %p85
        $region38: #{tpu_custom_call.1} parent=27 // pred_check_branch
          %193 = sbr.rel (%p191) target = $region40
        $region39: #{tpu_custom_call.1} parent=27 // pred_region
          %s195 = ssub.s32 128, 128
          %196 = vsyncadd %s187, %s195
          %s197 = smul.addr %s20, 128
          %s198 = scalar_lea.hbm %s2, %s197
          %s200 = sshll.u32 %s190, 4
          %s201 = int_to_ptr.vmem [resolvable:$true] %s200
          %203 = dma.vmem_to_hbm [thread:$0]  %s201, 128, %s198, %s187
        $region40: #{tpu_custom_call.1} parent=27 // pred_fallthru
          _
      $region28: #{tpu_custom_call.1} parent=5 // pred_fallthru
        _
      %p204 = scmp.le.s32.totalorder 2, %s15
      // Predicated region
      $region41: #{tpu_custom_call.1} parent=5 // pred_check
        %p205 = pneg %p204
      $region42: #{tpu_custom_call.1} parent=5 // pred_check_branch
        %207 = sbr.rel (%p205) target = $region44
      $region43: #{tpu_custom_call.1} parent=5 // pred_region
        %s208 = ssub.s32 %s15, 2
        // Predicated region
        $region45: #{tpu_custom_call.1} parent=43 // pred_check
          %p209 = pneg %p91
        $region46: #{tpu_custom_call.1} parent=43 // pred_check_branch
          %211 = sbr.rel (%p209) target = $region48
        $region47: #{tpu_custom_call.1} parent=43 // pred_region
          %s212 = sand.u32 %s76, 1
          %s213 = scalar_lea.sflag [#allocation4], %s212
          %s214 = sand.u32 %s76, 1
          %s215 = smul.addr %s214, 8
          %s216 = scalar_lea.vmem [#allocation7], %s215
          %217 = dma.done %s213, 128
        $region48: #{tpu_custom_call.1} parent=43 // pred_fallthru
          _
      $region44: #{tpu_custom_call.1} parent=5 // pred_fallthru
        _
    $region6: #{tpu_custom_call.1} parent=1 // loop_footer
      %s19 = sadd.s32 1, %s15
    $region7: #{tpu_custom_call.1} parent=1 // loop_footer_branch
      %14 = sbr.rel target = $region3
    $region8: #{tpu_custom_call.1} parent=1 // loop_exit
      _
    %218 = vsyncpa [#allocation3], 1
    %s219 = scalar_lea.sflag [#allocation3], 1
    %220 = vsyncpa %s219, 1
    %221 = vsyncpa [#allocation4], 1
    %s222 = scalar_lea.sflag [#allocation4], 1
    %223 = vsyncpa %s222, 1
    %224 = vsyncpa [#allocation5], 1
    %s225 = scalar_lea.sflag [#allocation5], 1
    %226 = vsyncpa %s225, 1

</llo_original>
